<compile_context>
chip_gen: v7x
topology: tpu7x:2x2x1
jax: 0.10.0
libtpu: 0.0.40
codegen_flags: <defaults>
</compile_context>

<pallas_src>
import functools

import jax
import jax.numpy as jnp
import numpy as np
from jax.experimental import pallas as pl
from jax.experimental.pallas import tpu as pltpu


def _round_up(x, m):
    return ((x + m - 1) // m) * m


def _cdiv(a, b):
    return -(-a // b)


def _choose_k_tile_m(N, d_in, target=2048):
    """Largest m dividing N with m*d_in <= target and m*d_in a lane multiple (128).

    Falls back to m=N (full fold) when no such m exists or K is already small.
    """
    K = N * d_in
    if K <= target:
        return N
    for m in range(N, 0, -1):
        tk = m * d_in
        if N % m == 0 and tk <= target and tk % 128 == 0:
            return m
    return N  # fallback: full fold (correct, just less VMEM-frugal for huge N*d_in)


def _choose_tb(B, t_k, d_out_p, x_itemsize, out_itemsize, budget_bytes):
    """Batch tile: fits a ~28 MiB VMEM budget, targets >= ~8 grid steps, MXU-friendly rows."""
    per_row = 2 * t_k * x_itemsize + 2 * d_out_p * out_itemsize + d_out_p * 4
    fixed = (t_k * d_out_p + d_out_p * d_out_p + 2 * d_out_p) * 4
    avail = max(budget_bytes - fixed, per_row * 8)
    tb_vmem = avail // per_row
    tb_steps = _round_up(_cdiv(B, 8), 8)  # aim for >= 8 batch steps (>= 2 for v7x megacore)
    tb = min(int(tb_vmem), int(tb_steps), 1024)
    if tb >= 128:
        tb = (tb // 128) * 128  # full MXU rows
    else:
        tb = _round_up(tb, 8)  # sublane multiple
    tb = min(tb, _round_up(B, 8))
    return max(tb, 8)


def invariant_layer_kernel(x_ref, w1_ref, b1_ref, w2_ref, b2_ref, o_ref, acc_ref):
    # x_ref : [TB, t_k]           (mean already folded into w1')
    # w1_ref: [t_k, d_out_p]      b1_ref: [1, d_out_p]
    # w2_ref: [d_out_p, d_out_p]  b2_ref: [1, d_out_p]
    # o_ref : [TB, d_out_p]       acc_ref: [TB, d_out_p] f32 scratch
    k = pl.program_id(1)

    @pl.when(k == 0)
    def _():
        acc_ref[...] = jnp.zeros_like(acc_ref)

    acc_ref[...] += jnp.dot(x_ref[...], w1_ref[...], preferred_element_type=jnp.float32)

    @pl.when(k == pl.num_programs(1) - 1)
    def _():
        h = jnp.maximum(acc_ref[...] + b1_ref[...], 0.0)          # Linear + ReLU
        out = jnp.dot(h.astype(w2_ref.dtype), w2_ref[...],
                      preferred_element_type=jnp.float32) + b2_ref[...]
        o_ref[...] = out.astype(o_ref.dtype)


def prepare_params(w1, b1, w2, b2, N):
    """One-time weight prep (hoisted out of the per-call path).

    w1: [d_in, d_out] ([in, out], i.e. nn.Linear.weight.T), b1: [d_out],
    w2: [d_out, d_out] ([in, out]),                         b2: [d_out].
    Returns (w1_folded [t_k, d_out_p], b1 [1, d_out_p], w2 [d_out_p, d_out_p], b2 [1, d_out_p]).
    """
    d_in, d_out = w1.shape
    m = _choose_k_tile_m(N, d_in)
    d_out_p = _round_up(d_out, 128)  # lane-dense output / full MXU columns
    pad_c = d_out_p - d_out

    w1f = jnp.tile(w1 * (1.0 / N), (m, 1))  # [m*d_in, d_out]
    if pad_c:
        w1f = jnp.pad(w1f, ((0, 0), (0, pad_c)))
        b1p = jnp.pad(b1, (0, pad_c))
        w2p = jnp.pad(w2, ((0, pad_c), (0, pad_c)))
        b2p = jnp.pad(b2, (0, pad_c))
    else:
        b1p, w2p, b2p = b1, w2, b2
    return w1f, b1p.reshape(1, d_out_p), w2p, b2p.reshape(1, d_out_p)


@functools.partial(jax.jit, static_argnames=("d_out",))
def invariant_layer_fwd(x, w1f, b1p, w2p, b2p, *, d_out):
    """x: [B, N, d_in]; prepared params from prepare_params. Returns [B, d_out]."""
    B, N, d_in = x.shape
    K = N * d_in
    t_k, d_out_p = w1f.shape
    num_k = K // t_k  # exact: t_k = m*d_in with m | N

    x2d = x.reshape(B, K)  # contiguous in HBM -> free layout plumbing
    x_itemsize = jnp.dtype(x.dtype).itemsize

    vmem_budget = 28 * 1024 * 1024
    TB = _choose_tb(B, t_k, d_out_p, x_itemsize, x_itemsize, vmem_budget)
    grid = (_cdiv(B, TB), num_k)

    cost = pl.CostEstimate(
        flops=2 * B * K * d_out_p + 2 * B * d_out_p * d_out_p,
        transcendentals=0,
        bytes_accessed=B * K * x_itemsize
        + (t_k * d_out_p + d_out_p * d_out_p + 2 * d_out_p) * 4
        + B * d_out_p * x_itemsize,
    )

    resident = dict(pipeline_mode=pl.Buffered(1))  # constant index_map -> single buffer
    out = pl.pallas_call(
        invariant_layer_kernel,
        out_shape=jax.ShapeDtypeStruct((B, d_out_p), x.dtype),
        grid=grid,
        in_specs=[
            pl.BlockSpec((TB, t_k), lambda i, k: (i, k)),                    # x stream
            pl.BlockSpec((t_k, d_out_p), lambda i, k: (0, 0), **resident),   # W1' resident
            pl.BlockSpec((1, d_out_p), lambda i, k: (0, 0), **resident),     # b1 resident
            pl.BlockSpec((d_out_p, d_out_p), lambda i, k: (0, 0), **resident),  # W2 resident
            pl.BlockSpec((1, d_out_p), lambda i, k: (0, 0), **resident),     # b2 resident
        ],
        out_specs=pl.BlockSpec((TB, d_out_p), lambda i, k: (i, 0)),
        scratch_shapes=[pltpu.VMEM((TB, d_out_p), jnp.float32)],
        compiler_params=pltpu.CompilerParams(
            dimension_semantics=("parallel", "arbitrary"),
            vmem_limit_bytes=48 * 1024 * 1024,
        ),
        cost_estimate=cost,
    )(x2d, w1f, b1p, w2p, b2p)

    return out[:, :d_out]


def invariant_layer(x, w1, b1, w2, b2):
    """Convenience end-to-end wrapper (prep + kernel). Prefer calling prepare_params once."""
    w1f, b1p, w2p, b2p = prepare_params(w1, b1, w2, b2, x.shape[1])
    return invariant_layer_fwd(x, w1f, b1p, w2p, b2p, d_out=w1.shape[1])


def reference(x, w1, b1, w2, b2):
    xm = jnp.mean(x.astype(jnp.float32), axis=1)
    h = jnp.maximum(xm @ w1 + b1, 0.0)
    return h @ w2 + b2


if __name__ == "__main__":
    B, N, d_in, d_out = 2, 8, 32, 32

    key = jax.random.PRNGKey(0)
    kx, kw1, kb1, kw2, kb2 = jax.random.split(key, 5)

    x = jax.random.normal(kx, (B, N, d_in), dtype=jnp.float32)

    # PyTorch Linear-style uniform fan-in init, stored as [in, out].
    bound1 = 1.0 / np.sqrt(d_in)
    w1 = jax.random.uniform(kw1, (d_in, d_out), jnp.float32, -bound1, bound1)
    b1 = jax.random.uniform(kb1, (d_out,), jnp.float32, -bound1, bound1)
    bound2 = 1.0 / np.sqrt(d_out)
    w2 = jax.random.uniform(kw2, (d_out, d_out), jnp.float32, -bound2, bound2)
    b2 = jax.random.uniform(kb2, (d_out,), jnp.float32, -bound2, bound2)

    # One-time weight prep (fold mean into W1, pad d_out to lane width).
    w1f, b1p, w2p, b2p = prepare_params(w1, b1, w2, b2, N)

    out = jax.block_until_ready(invariant_layer_fwd(x, w1f, b1p, w2p, b2p, d_out=d_out))
    ref = jax.block_until_ready(reference(x, w1, b1, w2, b2))
    np.testing.assert_allclose(np.asarray(out), np.asarray(ref), rtol=1e-5, atol=1e-5)

    print("KERNEL_OK")
</pallas_src>

<mosaic_0001>
module attributes {stable_mosaic.version = 11 : i64} {
  func.func @invariant_layer_kernel(%arg0: i32, %arg1: i32, %arg2: memref<8x256xf32, #tpu.memory_space<vmem>>, %arg3: memref<256x128xf32, #tpu.memory_space<vmem>>, %arg4: memref<1x128xf32, #tpu.memory_space<vmem>>, %arg5: memref<128x128xf32, #tpu.memory_space<vmem>>, %arg6: memref<1x128xf32, #tpu.memory_space<vmem>>, %arg7: memref<8x128xf32, #tpu.memory_space<vmem>>, %arg8: memref<8x128xf32, #tpu.memory_space<vmem>>) attributes {dimension_semantics = [#tpu.dimension_semantics<parallel>, #tpu.dimension_semantics<arbitrary>], iteration_bounds = array<i64: 1, 1>, scalar_prefetch = 0 : i64, scratch_operands = 1 : i64, tpu.core_type = #tpu.core_type<tc>, window_params = [{transform_indices = @transform_0, window_bounds = array<i64: 8, 256>}, {pipeline_mode = #tpu.pipeline_mode<synchronous>, transform_indices = @transform_1, window_bounds = array<i64: 256, 128>}, {pipeline_mode = #tpu.pipeline_mode<synchronous>, transform_indices = @transform_2, window_bounds = array<i64: 1, 128>}, {pipeline_mode = #tpu.pipeline_mode<synchronous>, transform_indices = @transform_3, window_bounds = array<i64: 128, 128>}, {pipeline_mode = #tpu.pipeline_mode<synchronous>, transform_indices = @transform_4, window_bounds = array<i64: 1, 128>}, {transform_indices = @transform_5, window_bounds = array<i64: 8, 128>}]} {
    %c0_i32 = arith.constant 0 : i32
    %0 = arith.cmpi eq, %arg1, %c0_i32 : i32
    %1 = arith.extui %0 : i1 to i32
    %c0_i32_0 = arith.constant 0 : i32
    %2 = arith.cmpi ne, %1, %c0_i32_0 : i32
    scf.if %2 {
      %cst_10 = arith.constant 0.000000e+00 : f32
      %12 = vector.broadcast %cst_10 : f32 to vector<8x128xf32>
      %c0_11 = arith.constant 0 : index
      %c0_12 = arith.constant 0 : index
      %13 = vector.load %arg8[%c0_11, %c0_12] : memref<8x128xf32, #tpu.memory_space<vmem>>, vector<8x128xf32>
      tpu.vector_store %arg8[%c0_11, %c0_12], %12 {strides = array<i32>} : memref<8x128xf32, #tpu.memory_space<vmem>>, vector<8x128xf32>,
    } else {
    }
    %c0 = arith.constant 0 : index
    %c0_1 = arith.constant 0 : index
    %3 = vector.load %arg8[%c0, %c0_1] : memref<8x128xf32, #tpu.memory_space<vmem>>, vector<8x128xf32>
    %c0_2 = arith.constant 0 : index
    %c0_3 = arith.constant 0 : index
    %4 = vector.load %arg2[%c0_2, %c0_3] : memref<8x256xf32, #tpu.memory_space<vmem>>, vector<8x256xf32>
    %c0_4 = arith.constant 0 : index
    %c0_5 = arith.constant 0 : index
    %5 = vector.load %arg3[%c0_4, %c0_5] : memref<256x128xf32, #tpu.memory_space<vmem>>, vector<256x128xf32>
    %cst = arith.constant dense<0.000000e+00> : vector<8x128xf32>
    %6 = tpu.matmul %4, %5, %cst {dimension_numbers = #tpu.dot_dimension_numbers<[1], [0], [0], [1], [0, 0, 1, 1], [], []>} : vector<8x256xf32>, vector<256x128xf32>, vector<8x128xf32> -> vector<8x128xf32>
    %7 = arith.addf %3, %6 : vector<8x128xf32>
    %c0_6 = arith.constant 0 : index
    %c0_7 = arith.constant 0 : index
    %8 = vector.load %arg8[%c0_6, %c0_7] : memref<8x128xf32, #tpu.memory_space<vmem>>, vector<8x128xf32>
    tpu.vector_store %arg8[%c0_6, %c0_7], %7 {strides = array<i32>} : memref<8x128xf32, #tpu.memory_space<vmem>>, vector<8x128xf32>,
    %c0_i32_8 = arith.constant 0 : i32
    %9 = arith.cmpi eq, %arg1, %c0_i32_8 : i32
    %10 = arith.extui %9 : i1 to i32
    %c0_i32_9 = arith.constant 0 : i32
    %11 = arith.cmpi ne, %10, %c0_i32_9 : i32
    scf.if %11 {
      %c0_10 = arith.constant 0 : index
      %c0_11 = arith.constant 0 : index
      %12 = vector.load %arg8[%c0_10, %c0_11] : memref<8x128xf32, #tpu.memory_space<vmem>>, vector<8x128xf32>
      %c0_12 = arith.constant 0 : index
      %c0_13 = arith.constant 0 : index
      %13 = vector.load %arg4[%c0_12, %c0_13] : memref<1x128xf32, #tpu.memory_space<vmem>>, vector<1x128xf32>
      %14 = vector.broadcast %13 : vector<1x128xf32> to vector<8x128xf32>
      %15 = arith.addf %12, %14 : vector<8x128xf32>
      %cst_14 = arith.constant 0.000000e+00 : f32
      %16 = vector.broadcast %cst_14 : f32 to vector<8x128xf32>
      %17 = arith.maximumf %15, %16 : vector<8x128xf32>
      %c0_15 = arith.constant 0 : index
      %c0_16 = arith.constant 0 : index
      %18 = vector.load %arg5[%c0_15, %c0_16] : memref<128x128xf32, #tpu.memory_space<vmem>>, vector<128x128xf32>
      %cst_17 = arith.constant dense<0.000000e+00> : vector<8x128xf32>
      %19 = tpu.matmul %17, %18, %cst_17 {dimension_numbers = #tpu.dot_dimension_numbers<[1], [0], [0], [1], [0, 0, 1, 1], [], []>} : vector<8x128xf32>, vector<128x128xf32>, vector<8x128xf32> -> vector<8x128xf32>
      %c0_18 = arith.constant 0 : index
      %c0_19 = arith.constant 0 : index
      %20 = vector.load %arg6[%c0_18, %c0_19] : memref<1x128xf32, #tpu.memory_space<vmem>>, vector<1x128xf32>
      %21 = vector.broadcast %20 : vector<1x128xf32> to vector<8x128xf32>
      %22 = arith.addf %19, %21 : vector<8x128xf32>
      %c0_20 = arith.constant 0 : index
      %c0_21 = arith.constant 0 : index
      %23 = vector.load %arg7[%c0_20, %c0_21] : memref<8x128xf32, #tpu.memory_space<vmem>>, vector<8x128xf32>
      tpu.vector_store %arg7[%c0_20, %c0_21], %22 {strides = array<i32>} : memref<8x128xf32, #tpu.memory_space<vmem>>, vector<8x128xf32>,
    } else {
    }
    return
  }
  func.func @transform_0(%arg0: i32, %arg1: i32) -> (i32, i32) {
    %c0_i32 = arith.constant 0 : i32
    return %arg0, %arg1 : i32, i32
  }
  func.func @transform_1(%arg0: i32, %arg1: i32) -> (i32, i32) {
    %c0_i32 = arith.constant 0 : i32
    %c0_i32_0 = arith.constant 0 : i32
    %c0_i32_1 = arith.constant 0 : i32
    return %c0_i32, %c0_i32_0 : i32, i32
  }
  func.func @transform_2(%arg0: i32, %arg1: i32) -> (i32, i32) {
    %c0_i32 = arith.constant 0 : i32
    %c0_i32_0 = arith.constant 0 : i32
    %c0_i32_1 = arith.constant 0 : i32
    return %c0_i32, %c0_i32_0 : i32, i32
  }
  func.func @transform_3(%arg0: i32, %arg1: i32) -> (i32, i32) {
    %c0_i32 = arith.constant 0 : i32
    %c0_i32_0 = arith.constant 0 : i32
    %c0_i32_1 = arith.constant 0 : i32
    return %c0_i32, %c0_i32_0 : i32, i32
  }
  func.func @transform_4(%arg0: i32, %arg1: i32) -> (i32, i32) {
    %c0_i32 = arith.constant 0 : i32
    %c0_i32_0 = arith.constant 0 : i32
    %c0_i32_1 = arith.constant 0 : i32
    return %c0_i32, %c0_i32_0 : i32, i32
  }
  func.func @transform_5(%arg0: i32, %arg1: i32) -> (i32, i32) {
    %c0_i32 = arith.constant 0 : i32
    %c0_i32_0 = arith.constant 0 : i32
    return %arg0, %c0_i32 : i32, i32
  }
}

</mosaic_0001>

<llo_original>
// kernel: invariant_layer_fwd.1
$region0: #{invariant_layer_fwd.1}
  #allocation0 [shape = 'u32[]', space=smem, size = 0x4, offset = 0x4, fixed_abs, tag = 'smem constant byte address 0x4 - core index']
  #allocation1 [shape = 'u32[144,128]{1,0:T(1,128)}', space=vmem, size = 0x12000, scoped, tag = 'internal scratch']
  #allocation2 [shape = 'f32[8,128]{1,0:T(8,128)}', space=vmem, size = 0x1000, scoped, tag = 'scratch operand']
  %s0 = inlined_call_operand.vmem [shape: f32[2,256], index: 0, kind: input, shape index: {}]
  %s1 = inlined_call_operand.hbm [shape: f32[256,128], index: 1, kind: input, shape index: {}]
  %s2 = inlined_call_operand.vmem [shape: f32[1,128], index: 2, kind: input, shape index: {}]
  %s3 = inlined_call_operand.hbm [shape: f32[128,128], index: 3, kind: input, shape index: {}]
  %s4 = inlined_call_operand.vmem [shape: f32[1,128], index: 4, kind: input, shape index: {}]
  %s5 = inlined_call_operand.hbm [shape: f32[2,128], index: 5, kind: output, shape index: {}]
  %s6 = sld [smem:[#allocation0]]
  $region46: #{invariant_layer_fwd.1} parent=0
    _
  %s8 = ssub.s32 1, %s6
  %s9 = scalar_select 0, %s8, %s6
  $region1: #{invariant_layer_fwd.1} parent=0
    #allocation3 [shape = 'u8[131072]{0}', space=vmem, size = 0x20000, scoped, tag = 'input window, operand 1, single buffered']
    #allocation4 [shape = 's32[1]{0}', space=sflag, size = 0x4, scoped, tag = 'scoped memory for invariant_layer_fwd.1']
    #allocation5 [shape = 's32[1]{0}', space=sflag, size = 0x4, scoped, tag = 'scoped memory for invariant_layer_fwd.1']
    #allocation6 [shape = 'u8[65536]{0}', space=vmem, size = 0x10000, scoped, tag = 'input window, operand 3, single buffered']
    #allocation7 [shape = 's32[1]{0}', space=sflag, size = 0x4, scoped, tag = 'scoped memory for invariant_layer_fwd.1']
    #allocation8 [shape = 'u8[4096]{0}', space=vmem, size = 0x1000, scoped, tag = 'output window, operand 0, single buffered']
    %10 = vsyncpa [#allocation4], 0
    %11 = vsyncpa [#allocation7], 0
    %12 = vsyncpa [#allocation5], 0
    // Predicated region
    $region2: #{invariant_layer_fwd.1} parent=1 // pred_check
      _
    $region3: #{invariant_layer_fwd.1} parent=1 // pred_check_branch
      %14 = sbr.rel (0) target = $region5
    $region4: #{invariant_layer_fwd.1} parent=1 // pred_region
      _
    $region5: #{invariant_layer_fwd.1} parent=1 // pred_fallthru
      _
    // Predicated region
    $region6: #{invariant_layer_fwd.1} parent=1 // pred_check
      _
    $region7: #{invariant_layer_fwd.1} parent=1 // pred_check_branch
      %16 = sbr.rel (0) target = $region9
    $region8: #{invariant_layer_fwd.1} parent=1 // pred_region
      %s18 = ssub.s32 4096, 4096
      %19 = vsyncadd [#allocation4], %s18
      %s20 = sshll.u32 [#allocation3], 4
      %s21 = int_to_ptr.vmem [resolvable:$true] %s20
      %26 = dma.hbm_to_vmem [thread:$0]  %s1, 4096, %s21, [#allocation4], 128, 128, 8
    $region9: #{invariant_layer_fwd.1} parent=1 // pred_fallthru
      _
    // Predicated region
    $region10: #{invariant_layer_fwd.1} parent=1 // pred_check
      _
    $region11: #{invariant_layer_fwd.1} parent=1 // pred_check_branch
      %28 = sbr.rel (0) target = $region13
    $region12: #{invariant_layer_fwd.1} parent=1 // pred_region
      _
    $region13: #{invariant_layer_fwd.1} parent=1 // pred_fallthru
      _
    // Predicated region
    $region14: #{invariant_layer_fwd.1} parent=1 // pred_check
      _
    $region15: #{invariant_layer_fwd.1} parent=1 // pred_check_branch
      %30 = sbr.rel (0) target = $region17
    $region16: #{invariant_layer_fwd.1} parent=1 // pred_region
      %s32 = ssub.s32 2048, 2048
      %33 = vsyncadd [#allocation7], %s32
      %s34 = sshll.u32 [#allocation6], 4
      %s35 = int_to_ptr.vmem [resolvable:$true] %s34
      %40 = dma.hbm_to_vmem [thread:$0]  %s3, 2048, %s35, [#allocation7], 128, 128, 8
    $region17: #{invariant_layer_fwd.1} parent=1 // pred_fallthru
      _
    // Predicated region
    $region18: #{invariant_layer_fwd.1} parent=1 // pred_check
      _
    $region19: #{invariant_layer_fwd.1} parent=1 // pred_check_branch
      %42 = sbr.rel (0) target = $region21
    $region20: #{invariant_layer_fwd.1} parent=1 // pred_region
      _
    $region21: #{invariant_layer_fwd.1} parent=1 // pred_fallthru
      _
    // Predicated region
    $region22: #{invariant_layer_fwd.1} parent=1 // pred_check
      _
    $region23: #{invariant_layer_fwd.1} parent=1 // pred_check_branch
      %44 = sbr.rel (0) target = $region25
    $region24: #{invariant_layer_fwd.1} parent=1 // pred_region
      %45 = dma.done [#allocation4], 4096
    $region25: #{invariant_layer_fwd.1} parent=1 // pred_fallthru
      _
    // Predicated region
    $region26: #{invariant_layer_fwd.1} parent=1 // pred_check
      _
    $region27: #{invariant_layer_fwd.1} parent=1 // pred_check_branch
      %47 = sbr.rel (0) target = $region29
    $region28: #{invariant_layer_fwd.1} parent=1 // pred_region
      %48 = dma.done [#allocation7], 2048
    $region29: #{invariant_layer_fwd.1} parent=1 // pred_fallthru
      _
    %p49 = scmp.eq.s32.totalorder 0, 0
    // Predicated region
    $region30: #{invariant_layer_fwd.1} parent=1 // pred_check
      %p50 = pneg %p49
    $region31: #{invariant_layer_fwd.1} parent=1 // pred_check_branch
      %52 = sbr.rel (%p50) target = $region33
    $region32: #{invariant_layer_fwd.1} parent=1 // pred_region
      %53 = vst [vmem:[#allocation2] sm:$0xff] 0.0
    $region33: #{invariant_layer_fwd.1} parent=1 // pred_fallthru
      _
    %v54 = vld [vmem:[#allocation2] sm:$0xff]
    %v55 = vld [vmem:[%s0] sm:$0xf]
    %v56 = vld [vmem:[%s0 + $0x4] sm:$0xf]
    %v57 = vld [vmem:[%s0 + $0x8] sm:$0xf]
    %v58 = vld [vmem:[%s0 + $0xc] sm:$0xf]
    %v59 = vld [vmem:[#allocation3] sm:$0xff]
    %v60 = vld [vmem:[#allocation3 + $0x8] sm:$0xff]
    %v61 = vld [vmem:[#allocation3 + $0x10] sm:$0xff]
    %v62 = vld [vmem:[#allocation3 + $0x18] sm:$0xff]
    %v63 = vld [vmem:[#allocation3 + $0x20] sm:$0xff]
    %v64 = vld [vmem:[#allocation3 + $0x28] sm:$0xff]
    %v65 = vld [vmem:[#allocation3 + $0x30] sm:$0xff]
    %v66 = vld [vmem:[#allocation3 + $0x38] sm:$0xff]
    %v67 = vld [vmem:[#allocation3 + $0x40] sm:$0xff]
    %v68 = vld [vmem:[#allocation3 + $0x48] sm:$0xff]
    %v69 = vld [vmem:[#allocation3 + $0x50] sm:$0xff]
    %v70 = vld [vmem:[#allocation3 + $0x58] sm:$0xff]
    %v71 = vld [vmem:[#allocation3 + $0x60] sm:$0xff]
    %v72 = vld [vmem:[#allocation3 + $0x68] sm:$0xff]
    %v73 = vld [vmem:[#allocation3 + $0x70] sm:$0xff]
    %v74 = vld [vmem:[#allocation3 + $0x78] sm:$0xff]
    %v75 = vld [vmem:[#allocation3 + $0x80] sm:$0xff]
    %v76 = vld [vmem:[#allocation3 + $0x88] sm:$0xff]
    %v77 = vld [vmem:[#allocation3 + $0x90] sm:$0xff]
    %v78 = vld [vmem:[#allocation3 + $0x98] sm:$0xff]
    %v79 = vld [vmem:[#allocation3 + $0xa0] sm:$0xff]
    %v80 = vld [vmem:[#allocation3 + $0xa8] sm:$0xff]
    %v81 = vld [vmem:[#allocation3 + $0xb0] sm:$0xff]
    %v82 = vld [vmem:[#allocation3 + $0xb8] sm:$0xff]
    %v83 = vld [vmem:[#allocation3 + $0xc0] sm:$0xff]
    %v84 = vld [vmem:[#allocation3 + $0xc8] sm:$0xff]
    %v85 = vld [vmem:[#allocation3 + $0xd0] sm:$0xff]
    %v86 = vld [vmem:[#allocation3 + $0xd8] sm:$0xff]
    %v87 = vld [vmem:[#allocation3 + $0xe0] sm:$0xff]
    %v88 = vld [vmem:[#allocation3 + $0xe8] sm:$0xff]
    %v89 = vld [vmem:[#allocation3 + $0xf0] sm:$0xff]
    %v90 = vld [vmem:[#allocation3 + $0xf8] sm:$0xff]
    %v95 = vcombine.low %v55, %v56
    %v96 = vcombine.low %v57, %v58
    %v98 = vunpack.c.l.s4 1983009808
    %v99 = vunpack.c.0.s8 %v98
    %v100 = vlaneseq
    %v101 = vshrl.u32 %v100, 7
    %v102 = vsub.s32 %v99, %v101
    %v103 = vrot.slane %v95, %v102
    %v105 = vunpack.c.l.s4 1983009808
    %v106 = vunpack.c.0.s8 %v105
    %v107 = vlaneseq
    %v108 = vshrl.u32 %v107, 7
    %v109 = vsub.s32 %v106, %v108
    %v110 = vrot.slane %v96, %v109
    %v111 = vcombine.low %v103, %v110
    %v112 = vcombine.high %v103, %v110
    %115 = vmatprep.subr.mxu0 0.0
    %116 = vmatpush1.msra.mxu0 %v59
    %117 = vmatprep.subr.mxu0 0.0
    %118 = vmatpush1.msra.mxu0 %v60
    %119 = vmatprep.subr.mxu0 0.0
    %120 = vmatpush1.msra.mxu0 %v61
    %121 = vmatprep.subr.mxu0 0.0
    %122 = vmatpush1.msra.mxu0 %v62
    %123 = vmatprep.subr.mxu0 0.0
    %124 = vmatpush1.msra.mxu0 %v63
    %125 = vmatprep.subr.mxu0 0.0
    %126 = vmatpush1.msra.mxu0 %v64
    %127 = vmatprep.subr.mxu0 0.0
    %128 = vmatpush1.msra.mxu0 %v65
    %129 = vmatprep.subr.mxu0 0.0
    %130 = vmatpush1.msra.mxu0 %v66
    %131 = vmatprep.subr.mxu0 0.0
    %132 = vmatpush1.msra.mxu0 %v67
    %133 = vmatprep.subr.mxu0 0.0
    %134 = vmatpush1.msra.mxu0 %v68
    %135 = vmatprep.subr.mxu0 0.0
    %136 = vmatpush1.msra.mxu0 %v69
    %137 = vmatprep.subr.mxu0 0.0
    %138 = vmatpush1.msra.mxu0 %v70
    %139 = vmatprep.subr.mxu0 0.0
    %140 = vmatpush1.msra.mxu0 %v71
    %141 = vmatprep.subr.mxu0 0.0
    %142 = vmatpush1.msra.mxu0 %v72
    %143 = vmatprep.subr.mxu0 0.0
    %144 = vmatpush1.msra.mxu0 %v73
    %145 = vmatprep.subr.mxu0 0.0
    %146 = vmatpush1.msra.mxu0 %v74
    %147 = vmatprep.subr.mxu0 0.0
    %148 = vmatpush1.msra.mxu0 %v75
    %149 = vmatprep.subr.mxu0 0.0
    %150 = vmatpush1.msra.mxu0 %v76
    %151 = vmatprep.subr.mxu0 0.0
    %152 = vmatpush1.msra.mxu0 %v77
    %153 = vmatprep.subr.mxu0 0.0
    %154 = vmatpush1.msra.mxu0 %v78
    %155 = vmatprep.subr.mxu0 0.0
    %156 = vmatpush1.msra.mxu0 %v79
    %157 = vmatprep.subr.mxu0 0.0
    %158 = vmatpush1.msra.mxu0 %v80
    %159 = vmatprep.subr.mxu0 0.0
    %160 = vmatpush1.msra.mxu0 %v81
    %161 = vmatprep.subr.mxu0 0.0
    %162 = vmatpush1.msra.mxu0 %v82
    %163 = vmatprep.subr.mxu0 0.0
    %164 = vmatpush1.msra.mxu0 %v83
    %165 = vmatprep.subr.mxu0 0.0
    %166 = vmatpush1.msra.mxu0 %v84
    %167 = vmatprep.subr.mxu0 0.0
    %168 = vmatpush1.msra.mxu0 %v85
    %169 = vmatprep.subr.mxu0 0.0
    %170 = vmatpush1.msra.mxu0 %v86
    %171 = vmatprep.subr.mxu0 0.0
    %172 = vmatpush1.msra.mxu0 %v87
    %173 = vmatprep.subr.mxu0 0.0
    %174 = vmatpush1.msra.mxu0 %v88
    %175 = vmatprep.subr.mxu0 0.0
    %176 = vmatpush1.msra.mxu0 %v89
    %177 = vmatprep.subr.mxu0 0.0
    %178 = vmatpush1.msra.mxu0 %v90
    %179 = vmatprep.mubr.f32.mxu0 %v112
    %180 = vmatmul.mubr.f32.gmra.mrb[0].mxu0 %v111
    %v181 = vpop.f32.mrb[0].mxu0
    %v182 = vadd.f32 0.0, %v181
    %v183 = vpop.f32.mrb[0].mxu0
    %184 = vdwg.mxu0
    %v185 = vadd.f32 %v54, %v182
    %186 = vst [vmem:[#allocation2] sm:$0xff] %v185
    // Predicated region
    $region34: #{invariant_layer_fwd.1} parent=1 // pred_check
      %p187 = pneg %p49
    $region35: #{invariant_layer_fwd.1} parent=1 // pred_check_branch
      %189 = sbr.rel (%p187) target = $region37
    $region36: #{invariant_layer_fwd.1} parent=1 // pred_region
      %v190 = vld [vmem:[#allocation2] sm:$0xff]
      %v191 = vld [vmem:[%s2] sm:$0x1]
      %v193 = vlaneseq
      %v194 = vshrl.u32 %v193, 7
      %v195 = vsub.s32 0, %v194
      %v196 = vrot.slane %v191, %v195
      %v198 = vadd.f32 %v190, %v196
      %v199 = vmax.f32 %v198, 0.0
      %v200 = vld [vmem:[#allocation6] sm:$0xff]
      %v201 = vld [vmem:[#allocation6 + $0x8] sm:$0xff]
      %v202 = vld [vmem:[#allocation6 + $0x10] sm:$0xff]
      %v203 = vld [vmem:[#allocation6 + $0x18] sm:$0xff]
      %v204 = vld [vmem:[#allocation6 + $0x20] sm:$0xff]
      %v205 = vld [vmem:[#allocation6 + $0x28] sm:$0xff]
      %v206 = vld [vmem:[#allocation6 + $0x30] sm:$0xff]
      %v207 = vld [vmem:[#allocation6 + $0x38] sm:$0xff]
      %v208 = vld [vmem:[#allocation6 + $0x40] sm:$0xff]
      %v209 = vld [vmem:[#allocation6 + $0x48] sm:$0xff]
      %v210 = vld [vmem:[#allocation6 + $0x50] sm:$0xff]
      %v211 = vld [vmem:[#allocation6 + $0x58] sm:$0xff]
      %v212 = vld [vmem:[#allocation6 + $0x60] sm:$0xff]
      %v213 = vld [vmem:[#allocation6 + $0x68] sm:$0xff]
      %v214 = vld [vmem:[#allocation6 + $0x70] sm:$0xff]
      %v215 = vld [vmem:[#allocation6 + $0x78] sm:$0xff]
      %v216 = vld [vmem:[%s4] sm:$0x1]
      %v218 = vlaneseq
      %v219 = vshrl.u32 %v218, 7
      %v220 = vsub.s32 0, %v219
      %v221 = vrot.slane %v216, %v220
      %223 = vmatprep.subr.mxu0 0.0
      %224 = vmatpush1.msra.mxu0 %v200
      %225 = vmatprep.subr.mxu0 0.0
      %226 = vmatpush1.msra.mxu0 %v201
      %227 = vmatprep.subr.mxu0 0.0
      %228 = vmatpush1.msra.mxu0 %v202
      %229 = vmatprep.subr.mxu0 0.0
      %230 = vmatpush1.msra.mxu0 %v203
      %231 = vmatprep.subr.mxu0 0.0
      %232 = vmatpush1.msra.mxu0 %v204
      %233 = vmatprep.subr.mxu0 0.0
      %234 = vmatpush1.msra.mxu0 %v205
      %235 = vmatprep.subr.mxu0 0.0
      %236 = vmatpush1.msra.mxu0 %v206
      %237 = vmatprep.subr.mxu0 0.0
      %238 = vmatpush1.msra.mxu0 %v207
      %239 = vmatprep.subr.mxu0 0.0
      %240 = vmatpush1.msra.mxu0 %v208
      %241 = vmatprep.subr.mxu0 0.0
      %242 = vmatpush1.msra.mxu0 %v209
      %243 = vmatprep.subr.mxu0 0.0
      %244 = vmatpush1.msra.mxu0 %v210
      %245 = vmatprep.subr.mxu0 0.0
      %246 = vmatpush1.msra.mxu0 %v211
      %247 = vmatprep.subr.mxu0 0.0
      %248 = vmatpush1.msra.mxu0 %v212
      %249 = vmatprep.subr.mxu0 0.0
      %250 = vmatpush1.msra.mxu0 %v213
      %251 = vmatprep.subr.mxu0 0.0
      %252 = vmatpush1.msra.mxu0 %v214
      %253 = vmatprep.subr.mxu0 0.0
      %254 = vmatpush1.msra.mxu0 %v215
      %255 = vmatprep.subr.mxu0 0.0
      %256 = vmatpush1.msra.mxu0 0.0
      %257 = vmatprep.subr.mxu0 0.0
      %258 = vmatpush1.msra.mxu0 0.0
      %259 = vmatprep.subr.mxu0 0.0
      %260 = vmatpush1.msra.mxu0 0.0
      %261 = vmatprep.subr.mxu0 0.0
      %262 = vmatpush1.msra.mxu0 0.0
      %263 = vmatprep.subr.mxu0 0.0
      %264 = vmatpush1.msra.mxu0 0.0
      %265 = vmatprep.subr.mxu0 0.0
      %266 = vmatpush1.msra.mxu0 0.0
      %267 = vmatprep.subr.mxu0 0.0
      %268 = vmatpush1.msra.mxu0 0.0
      %269 = vmatprep.subr.mxu0 0.0
      %270 = vmatpush1.msra.mxu0 0.0
      %271 = vmatprep.subr.mxu0 0.0
      %272 = vmatpush1.msra.mxu0 0.0
      %273 = vmatprep.subr.mxu0 0.0
      %274 = vmatpush1.msra.mxu0 0.0
      %275 = vmatprep.subr.mxu0 0.0
      %276 = vmatpush1.msra.mxu0 0.0
      %277 = vmatprep.subr.mxu0 0.0
      %278 = vmatpush1.msra.mxu0 0.0
      %279 = vmatprep.subr.mxu0 0.0
      %280 = vmatpush1.msra.mxu0 0.0
      %281 = vmatprep.subr.mxu0 0.0
      %282 = vmatpush1.msra.mxu0 0.0
      %283 = vmatprep.subr.mxu0 0.0
      %284 = vmatpush1.msra.mxu0 0.0
      %285 = vmatprep.subr.mxu0 0.0
      %286 = vmatpush1.msra.mxu0 0.0
      %287 = vmatprep.mubr.f32.mxu0 0.0
      %288 = vmatmul.mubr.f32.gmra.mrb[0].mxu0 %v199
      %v289 = vpop.f32.mrb[0].mxu0
      %v290 = vadd.f32 %v221, %v289
      %v291 = vpop.f32.mrb[0].mxu0
      %292 = vdwg.mxu0
      %293 = vst [vmem:[#allocation8] sm:$0xff] %v290
    $region37: #{invariant_layer_fwd.1} parent=1 // pred_fallthru
      _
    // Predicated region
    $region38: #{invariant_layer_fwd.1} parent=1 // pred_check
      _
    $region39: #{invariant_layer_fwd.1} parent=1 // pred_check_branch
      %295 = sbr.rel (0) target = $region41
    $region40: #{invariant_layer_fwd.1} parent=1 // pred_region
      %s297 = ssub.s32 128, 32
      %298 = vsyncadd [#allocation5], %s297
      %s299 = sshll.u32 [#allocation8], 4
      %s300 = int_to_ptr.vmem [resolvable:$true] %s299
      %305 = dma.vmem_to_hbm [thread:$0]  %s300, 32, %s5, [#allocation5], 32, 32, 2
    $region41: #{invariant_layer_fwd.1} parent=1 // pred_fallthru
      _
    // Predicated region
    $region42: #{invariant_layer_fwd.1} parent=1 // pred_check
      _
    $region43: #{invariant_layer_fwd.1} parent=1 // pred_check_branch
      %307 = sbr.rel (0) target = $region45
    $region44: #{invariant_layer_fwd.1} parent=1 // pred_region
      %308 = dma.done [#allocation5], 128
    $region45: #{invariant_layer_fwd.1} parent=1 // pred_fallthru
      _
    %309 = vsyncpa [#allocation4], 1
    %310 = vsyncpa [#allocation7], 1
    %311 = vsyncpa [#allocation5], 1

</llo_original>
